<compile_context>
chip_gen: v5e
topology: v5e:2x2
jax: 0.10.0
libtpu: 0.0.40
codegen_flags: <defaults>
</compile_context>

<pallas_src>
import functools

import jax
import jax.numpy as jnp
from jax.experimental import pallas as pl
from jax.experimental.pallas import tpu as pltpu


def _round_up(x, m):
    return ((x + m - 1) // m) * m


def _choose_tiles(B, L, itemsize):
    """Pick (row_tile, lane_tile) targeting ~8 MiB per input pipeline buffer."""
    sub = max(8, 32 // itemsize)          # min sublane multiple: f32=8, bf16=16, int8=32
    target = 8 * 1024 * 1024              # bytes per input buffer (x2 when double-buffered)

    # Lane (reduction) tile: take the full L when even a minimum-height tile
    # fits the budget, otherwise a large multiple of 128.
    tl_cap = max(128, (target // (sub * itemsize)) // 128 * 128)
    tl = L if L <= tl_cap else tl_cap

    # Row tile: fill the remaining budget, multiple of the sublane count.
    tb = max(sub, (target // (tl * itemsize)) // sub * sub)
    tb = min(tb, _round_up(B, sub))

    # Prefer >= 2 row tiles when B allows, so v7x's two TensorCores both
    # stream (row axis is the "parallel" grid axis).
    if tb >= B and B > sub:
        tb = _round_up(pl.cdiv(B, 2), sub)

    return tb, tl


def _global_avg_pool_kernel(x_ref, o_ref, acc_ref, *, total_l, lane_tile):
    # x_ref: (tb, tl) input tile; o_ref: (tb, 1) output; acc_ref: (tb, 1) f32 scratch.
    k = pl.program_id(1)

    @pl.when(k == 0)
    def _init():
        acc_ref[...] = jnp.zeros_like(acc_ref)

    x = x_ref[...]
    if total_l % lane_tile != 0:
        # Last lane tile is partial: zero the out-of-range reduction elements
        # so the (exact) divisor below stays correct.
        lane = jax.lax.broadcasted_iota(jnp.int32, x.shape, 1)
        x = jnp.where(k * lane_tile + lane < total_l, x, jnp.zeros_like(x))

    # Accumulate in f32 without materializing a full-width f32 copy of the tile.
    acc_ref[...] += jnp.sum(x, axis=-1, dtype=jnp.float32, keepdims=True)

    @pl.when(k == pl.num_programs(1) - 1)
    def _finalize():
        o_ref[...] = (acc_ref[...] * (1.0 / total_l)).astype(o_ref.dtype)


def global_avg_pooling_3d(x, *, block_rows=None, block_lanes=None):
    """Mean over the last three dims of x (ndim >= 3). (N, C, D, H, W) -> (N, C)."""
    assert x.ndim >= 3, "GlobalAvgPooling3d needs at least 3 dims"
    lead_shape = x.shape[:-3]
    D, H, W = x.shape[-3:]
    L = D * H * W
    B = 1
    for s in lead_shape:
        B *= s

    x2 = x.reshape(B, L)  # contiguous reshape: metadata only, no HBM copy

    itemsize = jnp.dtype(x.dtype).itemsize
    tb_auto, tl_auto = _choose_tiles(B, L, itemsize)
    tb = block_rows if block_rows is not None else tb_auto
    tl = block_lanes if block_lanes is not None else tl_auto

    grid = (pl.cdiv(B, tb), pl.cdiv(L, tl))
    kernel = functools.partial(_global_avg_pool_kernel, total_l=L, lane_tile=tl)

    out = pl.pallas_call(
        kernel,
        out_shape=jax.ShapeDtypeStruct((B, 1), x.dtype),
        grid_spec=pltpu.PrefetchScalarGridSpec(
            num_scalar_prefetch=0,
            grid=grid,
            in_specs=[pl.BlockSpec((tb, tl), lambda i, k: (i, k))],
            out_specs=pl.BlockSpec((tb, 1), lambda i, k: (i, 0)),
            scratch_shapes=[pltpu.VMEM((tb, 1), jnp.float32)],
        ),
        compiler_params=pltpu.CompilerParams(
            dimension_semantics=("parallel", "arbitrary"),
            vmem_limit_bytes=48 * 1024 * 1024,
        ),
    )(x2)

    return out.reshape(lead_shape)


if __name__ == "__main__":
    k1, k2 = jax.random.split(jax.random.PRNGKey(0))

    # Case 1: small NCDHW input (auto tiling: full L in one lane tile).
    x1 = jax.random.normal(k1, (2, 4, 4, 8, 16), dtype=jnp.float32)
    y1 = global_avg_pooling_3d(x1)
    jax.block_until_ready(y1)
    ref1 = jnp.mean(x1, axis=(-3, -2, -1))
    assert y1.shape == (2, 4), y1.shape
    assert jnp.allclose(y1, ref1, atol=1e-5, rtol=1e-5)

    # Case 2: odd sizes with forced L-tiling to exercise the accumulator and
    # lane-tail masking path (128 does not divide L = 5*7*9 = 315).
    x2 = jax.random.normal(k2, (2, 3, 5, 7, 9), dtype=jnp.float32)
    y2 = global_avg_pooling_3d(x2, block_rows=8, block_lanes=128)
    jax.block_until_ready(y2)
    ref2 = jnp.mean(x2, axis=(-3, -2, -1))
    assert y2.shape == (2, 3), y2.shape
    assert jnp.allclose(y2, ref2, atol=1e-5, rtol=1e-5)

    print("KERNEL_OK")
</pallas_src>

<mosaic_0001>
module attributes {stable_mosaic.version = 11 : i64} {
  func.func @_global_avg_pool_kernel(%arg0: i32, %arg1: i32, %arg2: memref<8x512xf32, #tpu.memory_space<vmem>>, %arg3: memref<8x1xf32, #tpu.memory_space<vmem>>, %arg4: memref<8x1xf32, #tpu.memory_space<vmem>>) attributes {dimension_semantics = [#tpu.dimension_semantics<parallel>, #tpu.dimension_semantics<arbitrary>], iteration_bounds = array<i64: 1, 1>, scalar_prefetch = 0 : i64, scratch_operands = 1 : i64, tpu.core_type = #tpu.core_type<tc>, window_params = [{transform_indices = @transform_0, window_bounds = array<i64: 8, 512>}, {transform_indices = @transform_1, window_bounds = array<i64: 8, 1>}]} {
    %c0_i32 = arith.constant 0 : i32
    %0 = arith.cmpi eq, %arg1, %c0_i32 : i32
    %1 = arith.extui %0 : i1 to i32
    %c0_i32_0 = arith.constant 0 : i32
    %2 = arith.cmpi ne, %1, %c0_i32_0 : i32
    scf.if %2 {
      %cst_8 = arith.constant 0.000000e+00 : f32
      %12 = vector.broadcast %cst_8 : f32 to vector<8x1xf32>
      %c0_9 = arith.constant 0 : index
      %c0_10 = arith.constant 0 : index
      %13 = vector.load %arg4[%c0_9, %c0_10] : memref<8x1xf32, #tpu.memory_space<vmem>>, vector<8x1xf32>
      tpu.vector_store %arg4[%c0_9, %c0_10], %12 {strides = array<i32>} : memref<8x1xf32, #tpu.memory_space<vmem>>, vector<8x1xf32>,
    } else {
    }
    %c0 = arith.constant 0 : index
    %c0_1 = arith.constant 0 : index
    %3 = vector.load %arg2[%c0, %c0_1] : memref<8x512xf32, #tpu.memory_space<vmem>>, vector<8x512xf32>
    %c0_2 = arith.constant 0 : index
    %c0_3 = arith.constant 0 : index
    %4 = vector.load %arg4[%c0_2, %c0_3] : memref<8x1xf32, #tpu.memory_space<vmem>>, vector<8x1xf32>
    %cst = arith.constant dense<0.000000e+00> : vector<8xf32>
    %5 = vector.multi_reduction <add>, %3, %cst [1] : vector<8x512xf32> to vector<8xf32>
    %6 = vector.shape_cast %5 : vector<8xf32> to vector<8x1xf32>
    %7 = arith.addf %4, %6 : vector<8x1xf32>
    %c0_4 = arith.constant 0 : index
    %c0_5 = arith.constant 0 : index
    %8 = vector.load %arg4[%c0_4, %c0_5] : memref<8x1xf32, #tpu.memory_space<vmem>>, vector<8x1xf32>
    tpu.vector_store %arg4[%c0_4, %c0_5], %7 {strides = array<i32>} : memref<8x1xf32, #tpu.memory_space<vmem>>, vector<8x1xf32>,
    %c0_i32_6 = arith.constant 0 : i32
    %9 = arith.cmpi eq, %arg1, %c0_i32_6 : i32
    %10 = arith.extui %9 : i1 to i32
    %c0_i32_7 = arith.constant 0 : i32
    %11 = arith.cmpi ne, %10, %c0_i32_7 : i32
    scf.if %11 {
      %c0_8 = arith.constant 0 : index
      %c0_9 = arith.constant 0 : index
      %12 = vector.load %arg4[%c0_8, %c0_9] : memref<8x1xf32, #tpu.memory_space<vmem>>, vector<8x1xf32>
      %cst_10 = arith.constant 0.001953125 : f32
      %13 = vector.broadcast %cst_10 : f32 to vector<8x1xf32>
      %14 = arith.mulf %12, %13 : vector<8x1xf32>
      %c0_11 = arith.constant 0 : index
      %c0_12 = arith.constant 0 : index
      %15 = vector.load %arg3[%c0_11, %c0_12] : memref<8x1xf32, #tpu.memory_space<vmem>>, vector<8x1xf32>
      tpu.vector_store %arg3[%c0_11, %c0_12], %14 {strides = array<i32>} : memref<8x1xf32, #tpu.memory_space<vmem>>, vector<8x1xf32>,
    } else {
    }
    return
  }
  func.func @transform_0(%arg0: i32, %arg1: i32) -> (i32, i32) {
    %c0_i32 = arith.constant 0 : i32
    return %arg0, %arg1 : i32, i32
  }
  func.func @transform_1(%arg0: i32, %arg1: i32) -> (i32, i32) {
    %c0_i32 = arith.constant 0 : i32
    %c0_i32_0 = arith.constant 0 : i32
    return %arg0, %c0_i32 : i32, i32
  }
}

</mosaic_0001>

<llo_original>
// kernel: tpu_custom_call.1
$region0: #{tpu_custom_call.1}
  #allocation0 [shape = 'u32[]', space=smem, size = 0x4, offset = 0x4, fixed_abs, tag = 'smem constant byte address 0x4 - core index']
  #allocation1 [shape = 'u32[72,128]{1,0:T(1,128)}', space=vmem, size = 0x9000, scoped, tag = 'internal scratch']
  #allocation2 [shape = 'f32[8,1]{1,0:T(8,128)}', space=vmem, size = 0x1000, scoped, tag = 'scratch operand']
  %s0 = inlined_call_operand.hbm [shape: f32[8,512], index: 0, kind: input, shape index: {}]
  %s1 = inlined_call_operand.vmem [shape: f32[8,1], index: 1, kind: output, shape index: {}]
  %s2 = sld [smem:[#allocation0]]
  $region26: #{tpu_custom_call.1} parent=0
    _
  %s4 = ssub.s32 1, %s2
  %s5 = scalar_select 0, %s4, %s2
  $region1: #{tpu_custom_call.1} parent=0
    #allocation3 [shape = 'u8[16384]{0}', space=vmem, size = 0x4000, scoped, tag = 'input window, operand 0, single buffered']
    #allocation4 [shape = 's32[1]{0}', space=sflag, size = 0x4, scoped, tag = 'scoped memory for tpu_custom_call.1']
    %6 = vsyncpa [#allocation4], 0
    // Predicated region
    $region2: #{tpu_custom_call.1} parent=1 // pred_check
      _
    $region3: #{tpu_custom_call.1} parent=1 // pred_check_branch
      %8 = sbr.rel (0) target = $region5
    $region4: #{tpu_custom_call.1} parent=1 // pred_region
      %10 = vsyncadd [#allocation4], 0
      %s12 = sshll.u32 %s0, 4
      %s13 = int_to_ptr.hbm [resolvable:$true] %s12
      %s14 = sshll.u32 [#allocation3], 4
      %s15 = int_to_ptr.vmem [resolvable:$true] %s14
      %17 = dma.hbm_to_vmem [thread:$0]  %s13, 512, %s15, [#allocation4]
    $region5: #{tpu_custom_call.1} parent=1 // pred_fallthru
      _
    // Predicated region
    $region6: #{tpu_custom_call.1} parent=1 // pred_check
      _
    $region7: #{tpu_custom_call.1} parent=1 // pred_check_branch
      %19 = sbr.rel (0) target = $region9
    $region8: #{tpu_custom_call.1} parent=1 // pred_region
      %21 = dma.done [#allocation4], 512
    $region9: #{tpu_custom_call.1} parent=1 // pred_fallthru
      _
    %p22 = scmp.eq.s32.totalorder 0, 0
    // Predicated region
    $region10: #{tpu_custom_call.1} parent=1 // pred_check
      %p23 = pneg %p22
    $region11: #{tpu_custom_call.1} parent=1 // pred_check_branch
      %25 = sbr.rel (%p23) target = $region13
    $region12: #{tpu_custom_call.1} parent=1 // pred_region
      %vm26 = vcmask 7168
      %27 = vst.msk [vmem:[#allocation2] sm:$0xff] %vm26, 0.0
    $region13: #{tpu_custom_call.1} parent=1 // pred_fallthru
      _
    %v28 = vld [vmem:[#allocation3] sm:$0xff]
    %v29 = vld [vmem:[#allocation3 + $0x8] sm:$0xff]
    %v30 = vld [vmem:[#allocation3 + $0x10] sm:$0xff]
    %v31 = vld [vmem:[#allocation3 + $0x18] sm:$0xff]
    %v32 = vld [vmem:[#allocation2] sm:$0xff]
    %v33 = vadd.f32 %v28, %v29
    %v34 = vadd.f32 %v33, %v30
    %v35 = vadd.f32 %v34, %v31
    %36 = vadd.xlane.f32.xlu0 %v35
    %v37 = vpop.xlane.xlu0 %36
    %v38 = vadd.f32 %v32, %v37
    %vm39 = vcmask 7168
    %40 = vst.msk [vmem:[#allocation2] sm:$0xff] %vm39, %v38
    // Predicated region
    $region14: #{tpu_custom_call.1} parent=1 // pred_check
      %p41 = pneg %p22
    $region15: #{tpu_custom_call.1} parent=1 // pred_check_branch
      %43 = sbr.rel (%p41) target = $region17
    $region16: #{tpu_custom_call.1} parent=1 // pred_region
      %v44 = vld [vmem:[#allocation2] sm:$0xff]
      %v45 = vmul.f32 %v44, 0.001953125
      %46 = vst.msk [vmem:[%s1] sm:$0xff] %vm39, %v45
    $region17: #{tpu_custom_call.1} parent=1 // pred_fallthru
      _
    // Predicated region
    $region18: #{tpu_custom_call.1} parent=1 // pred_check
      _
    $region19: #{tpu_custom_call.1} parent=1 // pred_check_branch
      %48 = sbr.rel (0) target = $region21
    $region20: #{tpu_custom_call.1} parent=1 // pred_region
      _
    $region21: #{tpu_custom_call.1} parent=1 // pred_fallthru
      _
    // Predicated region
    $region22: #{tpu_custom_call.1} parent=1 // pred_check
      _
    $region23: #{tpu_custom_call.1} parent=1 // pred_check_branch
      %50 = sbr.rel (0) target = $region25
    $region24: #{tpu_custom_call.1} parent=1 // pred_region
      _
    $region25: #{tpu_custom_call.1} parent=1 // pred_fallthru
      _
    %51 = vsyncpa [#allocation4], 1

</llo_original>
